<compile_context>
chip_gen: v5e
topology: v5e:2x2
jax: 0.10.0
libtpu: 0.0.40
codegen_flags: <defaults>
</compile_context>

<pallas_src>
import functools

import jax
import jax.numpy as jnp
from jax.experimental import pallas as pl
from jax.experimental.pallas import tpu as pltpu


# ----------------------------------------------------------------------------
# Pallas kernel: one full SAGELA layer (all batches) per invocation.
# ----------------------------------------------------------------------------
def _sagela_kernel(xs_ref, xd_ref, ef_ref, src_ref, dstc_ref, dstr_ref,
                   gwi_ref, gwj_ref, gwe_ref, ampw_ref,
                   wself_ref, wneigh_ref, bias_ref, gb_ref,
                   o_ref, *, apply_leaky_out, neg_slope=0.01):
    B, N, C = xs_ref.shape
    Nd = xd_ref.shape[1]
    E, EC = ef_ref.shape
    f32 = jnp.float32

    ef = ef_ref[...]                         # [E, EC]
    src_c = src_ref[...]                     # [E, 1] int32
    dst_c = dstc_ref[...]                    # [E, 1] int32
    dst_r = dstr_ref[...]                    # [1, E] int32

    # One-hot gather / scatter matrices built in-register from the index
    # vectors (no dense [E,N]/[Nd,E] matrices rebuilt in XLA or DMA'd).
    src_oh = (src_c == jax.lax.broadcasted_iota(jnp.int32, (E, N), 1)
              ).astype(f32)                                   # [E, N]
    dst_oh = (dst_c == jax.lax.broadcasted_iota(jnp.int32, (E, Nd), 1)
              ).astype(f32)                                   # [E, Nd]
    dst_oh_t = (dst_r == jax.lax.broadcasted_iota(jnp.int32, (Nd, E), 0)
                ).astype(f32)                                 # [Nd, E]

    deg = jnp.sum(dst_oh_t, axis=-1, keepdims=True)           # [Nd, 1] in-deg
    denom = jnp.maximum(deg, 1.0)

    gwi = gwi_ref[...]                       # [1, C]
    gwj = gwj_ref[...]                       # [1, C]
    gwe = gwe_ref[...]                       # [1, EC]
    gb = gb_ref[0, 0]                        # scalar from SMEM
    wself = wself_ref[...]                   # [C, O]
    wneigh = wneigh_ref[...]                 # [C, O]
    bias = bias_ref[...]                     # [1, O]

    # Batch-invariant per-edge terms (computed once, VPU/XLU only).
    gate_e = jnp.sum(ef * gwe, axis=-1, keepdims=True) + gb   # [E, 1]
    if EC == 1:
        # amp = edge_feature @ amp_weight degenerates to a broadcast outer
        # product [E,1]*[1,C] — keep it off the MXU.
        amp = ef * ampw_ref[...]                              # [E, C]
    else:
        amp = jnp.dot(ef, ampw_ref[...], preferred_element_type=f32)

    # B is small and static -> unrolled at trace time; all matmuls stay 2-D
    # in natural MXU orientation (no 3-D transposes).
    for b in range(B):
        xs_b = xs_ref[b]                     # [N, C]  source node features
        xd_b = xd_ref[b]                     # [Nd, C] destination (root) feats

        # In-kernel edge gathers (one-hot matmuls on the otherwise idle MXU).
        xj = jnp.dot(src_oh, xs_b, preferred_element_type=f32)   # [E, C]
        xi = jnp.dot(dst_oh, xd_b, preferred_element_type=f32)   # [E, C]

        # Gate: width-1 linear done as VPU mult + lane reduce (no MXU).
        gate = (jnp.sum(xi * gwi, axis=-1, keepdims=True)
                + jnp.sum(xj * gwj, axis=-1, keepdims=True)
                + gate_e)                                        # [E, 1]
        lamb = jax.nn.sigmoid(gate)

        msg = amp * xj * lamb                                    # [E, C]

        # Scatter-mean over destination nodes: one-hot^T matmul, then
        # degree normalization (matches segment-mean incl. deg == 0).
        aggr = jnp.dot(dst_oh_t, msg, preferred_element_type=f32) / denom

        # update: cat([x_dst, aggr], -1) @ W + b  ==  x_dst@W[:C]+aggr@W[C:]+b
        out = (jnp.dot(xd_b, wself, preferred_element_type=f32)
               + jnp.dot(aggr, wneigh, preferred_element_type=f32)
               + bias)                                           # [Nd, O]

        if apply_leaky_out:
            # F.leaky_relu between conv1 and conv2, fused here so it is done
            # once per node instead of per gathered edge in the next layer.
            out = jnp.where(out >= 0, out, neg_slope * out)

        o_ref[b] = out.astype(o_ref.dtype)


# ----------------------------------------------------------------------------
# One SAGELA layer: parameter splitting + single gridless pallas_call.
# ----------------------------------------------------------------------------
def sagela_layer(x_src, x_dst, edge_index, edge_feat, params,
                 apply_leaky_out=False):
    B, N, C = x_src.shape
    Nd = x_dst.shape[1]
    E, _ = edge_feat.shape
    O = params["weight"].shape[1]

    src = edge_index[0].astype(jnp.int32)
    dst = edge_index[1].astype(jnp.int32)
    src_c = src.reshape(E, 1)
    dst_c = dst.reshape(E, 1)
    dst_r = dst.reshape(1, E)

    gw = params["gate_w"]                        # (1, 2C + EC)
    gwi = gw[:, :C]                              # (1, C)
    gwj = gw[:, C:2 * C]                         # (1, C)
    gwe = gw[:, 2 * C:]                          # (1, EC)
    gb = params["gate_b"].reshape(1, 1).astype(jnp.float32)
    W = params["weight"]                         # (2C, O)
    wself, wneigh = W[:C], W[C:]
    bias = params["bias"].reshape(1, O)
    ampw = params["amp_weight"]                  # (EC, C)

    kernel = functools.partial(_sagela_kernel, apply_leaky_out=apply_leaky_out)

    vmem = pl.BlockSpec(memory_space=pltpu.MemorySpace.VMEM)
    smem = pl.BlockSpec(memory_space=pltpu.MemorySpace.SMEM)

    return pl.pallas_call(
        kernel,
        out_shape=jax.ShapeDtypeStruct((B, Nd, O), jnp.float32),
        in_specs=[vmem] * 13 + [smem],
        out_specs=vmem,
    )(x_src, x_dst, edge_feat, src_c, dst_c, dst_r,
      gwi, gwj, gwe, ampw, wself, wneigh, bias, gb)


# ----------------------------------------------------------------------------
# SAGELANet forward (skip_connection=False, as in the module default).
# ----------------------------------------------------------------------------
def sagela_net(X, g, params):
    # conv1, with F.leaky_relu fused into the kernel's output store.
    X1 = sagela_layer(X, X[:, g["res_n_id"][0]], g["edge_index"][0],
                      g["edge_weight"][0], params["conv1"],
                      apply_leaky_out=True)
    # conv2 consumes the already-activated features; no activation inside.
    X2 = sagela_layer(X1, X1[:, g["res_n_id"][1]], g["edge_index"][1],
                      g["edge_weight"][1], params["conv2"],
                      apply_leaky_out=False)
    return X2


# ----------------------------------------------------------------------------
# Pure-JAX reference for validation (literal transcription of the module).
# ----------------------------------------------------------------------------
def _sagela_ref(x_src, x_dst, edge_index, edge_feat, n_dst, params):
    src, dst = edge_index[0], edge_index[1]
    xi = x_dst[:, dst]
    xj = x_src[:, src]
    B, E, _ = xj.shape
    ef_rep = jnp.broadcast_to(edge_feat[None], (B, E, edge_feat.shape[1]))
    lamb_in = jnp.concatenate([xi, xj, ef_rep], axis=-1)
    lamb = jax.nn.sigmoid(lamb_in @ params["gate_w"].T + params["gate_b"])
    amp = edge_feat @ params["amp_weight"]
    msg = amp[None] * xj * lamb
    summed = jax.vmap(
        lambda m: jax.ops.segment_sum(m, dst, num_segments=n_dst))(msg)
    cnt = jax.ops.segment_sum(jnp.ones((E,), jnp.float32), dst,
                              num_segments=n_dst)
    aggr = summed / jnp.maximum(cnt, 1.0)[None, :, None]
    out = jnp.concatenate([x_dst, aggr], axis=-1) @ params["weight"]
    return out + params["bias"]


def _ref_net(X, g, params):
    X1 = _sagela_ref(X, X[:, g["res_n_id"][0]], g["edge_index"][0],
                     g["edge_weight"][0], g["size"][0][1], params["conv1"])
    X1 = jax.nn.leaky_relu(X1)
    X2 = _sagela_ref(X1, X1[:, g["res_n_id"][1]], g["edge_index"][1],
                     g["edge_weight"][1], g["size"][1][1], params["conv2"])
    return X2


# ----------------------------------------------------------------------------
# Deterministic parameter init + example run.
# ----------------------------------------------------------------------------
def _init_sagela_params(key, in_c, out_c, edge_c):
    k1, k2, k3, k4, k5 = jax.random.split(key, 5)
    return {
        "weight": 0.1 * jax.random.normal(k1, (2 * in_c, out_c), jnp.float32),
        "bias": 0.1 * jax.random.normal(k2, (out_c,), jnp.float32),
        "amp_weight": 0.1 * jax.random.normal(k3, (edge_c, in_c), jnp.float32),
        "gate_w": 0.1 * jax.random.normal(k4, (1, 2 * in_c + edge_c),
                                          jnp.float32),
        "gate_b": 0.1 * jax.random.normal(k5, (1,), jnp.float32),
    }


if __name__ == "__main__":
    key = jax.random.PRNGKey(0)
    ks = jax.random.split(key, 10)

    B, N, IN_C = 2, 16, 8
    SPATIAL, OUT_C, EDGE_C = 16, 4, 1
    N_DST1, E1 = 8, 32
    N_DST2, E2 = 4, 16

    X = jax.random.normal(ks[0], (B, N, IN_C), jnp.float32)

    edge_index_1 = jnp.stack([
        jax.random.randint(ks[1], (E1,), 0, N),
        jax.random.randint(ks[2], (E1,), 0, N_DST1)]).astype(jnp.int32)
    edge_index_2 = jnp.stack([
        jax.random.randint(ks[3], (E2,), 0, N_DST1),
        jax.random.randint(ks[4], (E2,), 0, N_DST2)]).astype(jnp.int32)
    edge_weight_1 = jax.random.normal(ks[5], (E1, EDGE_C), jnp.float32)
    edge_weight_2 = jax.random.normal(ks[6], (E2, EDGE_C), jnp.float32)

    g = {
        "edge_index": [edge_index_1, edge_index_2],
        "edge_weight": [edge_weight_1, edge_weight_2],
        "size": [(N, N_DST1), (N_DST1, N_DST2)],
        "res_n_id": [jnp.arange(N_DST1, dtype=jnp.int32),
                     jnp.arange(N_DST2, dtype=jnp.int32)],
    }

    params = {
        "conv1": _init_sagela_params(ks[7], IN_C, SPATIAL, EDGE_C),
        "conv2": _init_sagela_params(ks[8], SPATIAL, OUT_C, EDGE_C),
    }

    out = sagela_net(X, g, params)
    out = jax.block_until_ready(out)
    assert out.shape == (B, N_DST2, OUT_C), out.shape

    ref = _ref_net(X, g, params)
    assert jnp.allclose(out, ref, rtol=1e-4, atol=1e-5), (
        float(jnp.max(jnp.abs(out - ref))))

    print("KERNEL_OK")
</pallas_src>

<mosaic_0001>
module attributes {stable_mosaic.version = 11 : i64} {
  func.func @_sagela_kernel(%arg0: memref<2x16x8xf32, #tpu.memory_space<vmem>>, %arg1: memref<2x8x8xf32, #tpu.memory_space<vmem>>, %arg2: memref<32x1xf32, #tpu.memory_space<vmem>>, %arg3: memref<32x1xi32, #tpu.memory_space<vmem>>, %arg4: memref<32x1xi32, #tpu.memory_space<vmem>>, %arg5: memref<1x32xi32, #tpu.memory_space<vmem>>, %arg6: memref<1x8xf32, #tpu.memory_space<vmem>>, %arg7: memref<1x8xf32, #tpu.memory_space<vmem>>, %arg8: memref<1x1xf32, #tpu.memory_space<vmem>>, %arg9: memref<1x8xf32, #tpu.memory_space<vmem>>, %arg10: memref<8x16xf32, #tpu.memory_space<vmem>>, %arg11: memref<8x16xf32, #tpu.memory_space<vmem>>, %arg12: memref<1x16xf32, #tpu.memory_space<vmem>>, %arg13: memref<1x1xf32, #tpu.memory_space<smem>>, %arg14: memref<2x8x16xf32, #tpu.memory_space<vmem>>) attributes {dimension_semantics = [], scalar_prefetch = 0 : i64, scratch_operands = 0 : i64, tpu.core_type = #tpu.core_type<tc>} {
    %c0 = arith.constant 0 : index
    %c0_0 = arith.constant 0 : index
    %0 = vector.load %arg2[%c0, %c0_0] : memref<32x1xf32, #tpu.memory_space<vmem>>, vector<32x1xf32>
    %c0_1 = arith.constant 0 : index
    %c0_2 = arith.constant 0 : index
    %1 = vector.load %arg3[%c0_1, %c0_2] : memref<32x1xi32, #tpu.memory_space<vmem>>, vector<32x1xi32>
    %c0_3 = arith.constant 0 : index
    %c0_4 = arith.constant 0 : index
    %2 = vector.load %arg4[%c0_3, %c0_4] : memref<32x1xi32, #tpu.memory_space<vmem>>, vector<32x1xi32>
    %c0_5 = arith.constant 0 : index
    %c0_6 = arith.constant 0 : index
    %3 = vector.load %arg5[%c0_5, %c0_6] : memref<1x32xi32, #tpu.memory_space<vmem>>, vector<1x32xi32>
    %4 = tpu.iota {dimensions = array<i32: 1>} : vector<32x16xi32>
    %5 = vector.broadcast %1 : vector<32x1xi32> to vector<32x16xi32>
    %6 = arith.cmpi eq, %5, %4 : vector<32x16xi32>
    %7 = arith.extui %6 : vector<32x16xi1> to vector<32x16xi32>
    %8 = arith.sitofp %7 : vector<32x16xi32> to vector<32x16xf32>
    %9 = tpu.iota {dimensions = array<i32: 1>} : vector<32x8xi32>
    %10 = vector.broadcast %2 : vector<32x1xi32> to vector<32x8xi32>
    %11 = arith.cmpi eq, %10, %9 : vector<32x8xi32>
    %12 = arith.extui %11 : vector<32x8xi1> to vector<32x8xi32>
    %13 = arith.sitofp %12 : vector<32x8xi32> to vector<32x8xf32>
    %14 = tpu.iota {dimensions = array<i32: 0>} : vector<8x32xi32>
    %15 = vector.broadcast %3 : vector<1x32xi32> to vector<8x32xi32>
    %16 = arith.cmpi eq, %15, %14 : vector<8x32xi32>
    %17 = arith.extui %16 : vector<8x32xi1> to vector<8x32xi32>
    %18 = arith.sitofp %17 : vector<8x32xi32> to vector<8x32xf32>
    %cst = arith.constant dense<0.000000e+00> : vector<8xf32>
    %19 = vector.multi_reduction <add>, %18, %cst [1] : vector<8x32xf32> to vector<8xf32>
    %20 = vector.shape_cast %19 : vector<8xf32> to vector<8x1xf32>
    %cst_7 = arith.constant 1.000000e+00 : f32
    %21 = vector.broadcast %cst_7 : f32 to vector<8x1xf32>
    %22 = arith.maximumf %20, %21 : vector<8x1xf32>
    %c0_8 = arith.constant 0 : index
    %c0_9 = arith.constant 0 : index
    %23 = vector.load %arg6[%c0_8, %c0_9] : memref<1x8xf32, #tpu.memory_space<vmem>>, vector<1x8xf32>
    %c0_10 = arith.constant 0 : index
    %c0_11 = arith.constant 0 : index
    %24 = vector.load %arg7[%c0_10, %c0_11] : memref<1x8xf32, #tpu.memory_space<vmem>>, vector<1x8xf32>
    %c0_12 = arith.constant 0 : index
    %c0_13 = arith.constant 0 : index
    %25 = vector.load %arg8[%c0_12, %c0_13] : memref<1x1xf32, #tpu.memory_space<vmem>>, vector<1x1xf32>
    %c0_14 = arith.constant 0 : index
    %c0_15 = arith.constant 0 : index
    %26 = memref.load %arg13[%c0_14, %c0_15] : memref<1x1xf32, #tpu.memory_space<smem>>
    %c0_16 = arith.constant 0 : index
    %c0_17 = arith.constant 0 : index
    %27 = vector.load %arg10[%c0_16, %c0_17] : memref<8x16xf32, #tpu.memory_space<vmem>>, vector<8x16xf32>
    %c0_18 = arith.constant 0 : index
    %c0_19 = arith.constant 0 : index
    %28 = vector.load %arg11[%c0_18, %c0_19] : memref<8x16xf32, #tpu.memory_space<vmem>>, vector<8x16xf32>
    %c0_20 = arith.constant 0 : index
    %c0_21 = arith.constant 0 : index
    %29 = vector.load %arg12[%c0_20, %c0_21] : memref<1x16xf32, #tpu.memory_space<vmem>>, vector<1x16xf32>
    %30 = vector.broadcast %25 : vector<1x1xf32> to vector<32x1xf32>
    %31 = arith.mulf %0, %30 : vector<32x1xf32>
    %cst_22 = arith.constant dense<0.000000e+00> : vector<32xf32>
    %32 = vector.multi_reduction <add>, %31, %cst_22 [1] : vector<32x1xf32> to vector<32xf32>
    %33 = vector.shape_cast %32 : vector<32xf32> to vector<32x1xf32>
    %34 = vector.broadcast %26 : f32 to vector<32x1xf32>
    %35 = arith.addf %33, %34 : vector<32x1xf32>
    %c0_23 = arith.constant 0 : index
    %c0_24 = arith.constant 0 : index
    %36 = vector.load %arg9[%c0_23, %c0_24] : memref<1x8xf32, #tpu.memory_space<vmem>>, vector<1x8xf32>
    %37 = vector.broadcast %0 : vector<32x1xf32> to vector<32x8xf32>
    %38 = vector.broadcast %36 : vector<1x8xf32> to vector<32x8xf32>
    %39 = arith.mulf %37, %38 : vector<32x8xf32>
    %c0_25 = arith.constant 0 : index
    %c0_26 = arith.constant 0 : index
    %c0_27 = arith.constant 0 : index
    %40 = vector.load %arg0[%c0_25, %c0_26, %c0_27] : memref<2x16x8xf32, #tpu.memory_space<vmem>>, vector<1x16x8xf32>
    %41 = vector.shape_cast %40 : vector<1x16x8xf32> to vector<16x8xf32>
    %c0_28 = arith.constant 0 : index
    %c0_29 = arith.constant 0 : index
    %c0_30 = arith.constant 0 : index
    %42 = vector.load %arg1[%c0_28, %c0_29, %c0_30] : memref<2x8x8xf32, #tpu.memory_space<vmem>>, vector<1x8x8xf32>
    %43 = vector.shape_cast %42 : vector<1x8x8xf32> to vector<8x8xf32>
    %cst_31 = arith.constant dense<0.000000e+00> : vector<32x8xf32>
    %44 = tpu.matmul %8, %41, %cst_31 {dimension_numbers = #tpu.dot_dimension_numbers<[1], [0], [0], [1], [0, 0, 1, 1], [], []>} : vector<32x16xf32>, vector<16x8xf32>, vector<32x8xf32> -> vector<32x8xf32>
    %cst_32 = arith.constant dense<0.000000e+00> : vector<32x8xf32>
    %45 = tpu.matmul %13, %43, %cst_32 {dimension_numbers = #tpu.dot_dimension_numbers<[1], [0], [0], [1], [0, 0, 1, 1], [], []>} : vector<32x8xf32>, vector<8x8xf32>, vector<32x8xf32> -> vector<32x8xf32>
    %46 = vector.broadcast %23 : vector<1x8xf32> to vector<32x8xf32>
    %47 = arith.mulf %45, %46 : vector<32x8xf32>
    %cst_33 = arith.constant dense<0.000000e+00> : vector<32xf32>
    %48 = vector.multi_reduction <add>, %47, %cst_33 [1] : vector<32x8xf32> to vector<32xf32>
    %49 = vector.shape_cast %48 : vector<32xf32> to vector<32x1xf32>
    %50 = vector.broadcast %24 : vector<1x8xf32> to vector<32x8xf32>
    %51 = arith.mulf %44, %50 : vector<32x8xf32>
    %cst_34 = arith.constant dense<0.000000e+00> : vector<32xf32>
    %52 = vector.multi_reduction <add>, %51, %cst_34 [1] : vector<32x8xf32> to vector<32xf32>
    %53 = vector.shape_cast %52 : vector<32xf32> to vector<32x1xf32>
    %54 = arith.addf %49, %53 : vector<32x1xf32>
    %55 = arith.addf %54, %35 : vector<32x1xf32>
    %56 = arith.negf %55 : vector<32x1xf32>
    %57 = math.exp %56 : vector<32x1xf32>
    %cst_35 = arith.constant 1.000000e+00 : f32
    %58 = vector.broadcast %cst_35 : f32 to vector<32x1xf32>
    %59 = arith.addf %58, %57 : vector<32x1xf32>
    %60 = arith.divf %58, %59 : vector<32x1xf32>
    %61 = arith.mulf %39, %44 : vector<32x8xf32>
    %62 = vector.broadcast %60 : vector<32x1xf32> to vector<32x8xf32>
    %63 = arith.mulf %61, %62 : vector<32x8xf32>
    %cst_36 = arith.constant dense<0.000000e+00> : vector<8x8xf32>
    %64 = tpu.matmul %18, %63, %cst_36 {dimension_numbers = #tpu.dot_dimension_numbers<[1], [0], [0], [1], [0, 0, 1, 1], [], []>} : vector<8x32xf32>, vector<32x8xf32>, vector<8x8xf32> -> vector<8x8xf32>
    %65 = vector.broadcast %22 : vector<8x1xf32> to vector<8x8xf32>
    %66 = arith.divf %64, %65 : vector<8x8xf32>
    %cst_37 = arith.constant dense<0.000000e+00> : vector<8x16xf32>
    %67 = tpu.matmul %43, %27, %cst_37 {dimension_numbers = #tpu.dot_dimension_numbers<[1], [0], [0], [1], [0, 0, 1, 1], [], []>} : vector<8x8xf32>, vector<8x16xf32>, vector<8x16xf32> -> vector<8x16xf32>
    %cst_38 = arith.constant dense<0.000000e+00> : vector<8x16xf32>
    %68 = tpu.matmul %66, %28, %cst_38 {dimension_numbers = #tpu.dot_dimension_numbers<[1], [0], [0], [1], [0, 0, 1, 1], [], []>} : vector<8x8xf32>, vector<8x16xf32>, vector<8x16xf32> -> vector<8x16xf32>
    %69 = arith.addf %67, %68 : vector<8x16xf32>
    %70 = vector.broadcast %29 : vector<1x16xf32> to vector<8x16xf32>
    %71 = arith.addf %69, %70 : vector<8x16xf32>
    %cst_39 = arith.constant 0.000000e+00 : f32
    %72 = vector.broadcast %cst_39 : f32 to vector<8x16xf32>
    %73 = arith.cmpf oge, %71, %72 : vector<8x16xf32>
    %cst_40 = arith.constant 0.00999999977 : f32
    %74 = vector.broadcast %cst_40 : f32 to vector<8x16xf32>
    %75 = arith.mulf %74, %71 : vector<8x16xf32>
    %76 = arith.select %73, %71, %75 : vector<8x16xi1>, vector<8x16xf32>
    %c0_41 = arith.constant 0 : index
    %c0_42 = arith.constant 0 : index
    %c0_43 = arith.constant 0 : index
    %77 = vector.load %arg14[%c0_41, %c0_42, %c0_43] : memref<2x8x16xf32, #tpu.memory_space<vmem>>, vector<1x8x16xf32>
    %78 = vector.shape_cast %77 : vector<1x8x16xf32> to vector<8x16xf32>
    %79 = vector.shape_cast %76 : vector<8x16xf32> to vector<1x8x16xf32>
    tpu.vector_store %arg14[%c0_41, %c0_42, %c0_43], %79 {strides = array<i32>} : memref<2x8x16xf32, #tpu.memory_space<vmem>>, vector<1x8x16xf32>,
    %c1 = arith.constant 1 : index
    %c0_44 = arith.constant 0 : index
    %c0_45 = arith.constant 0 : index
    %80 = vector.load %arg0[%c1, %c0_44, %c0_45] : memref<2x16x8xf32, #tpu.memory_space<vmem>>, vector<1x16x8xf32>
    %81 = vector.shape_cast %80 : vector<1x16x8xf32> to vector<16x8xf32>
    %c1_46 = arith.constant 1 : index
    %c0_47 = arith.constant 0 : index
    %c0_48 = arith.constant 0 : index
    %82 = vector.load %arg1[%c1_46, %c0_47, %c0_48] : memref<2x8x8xf32, #tpu.memory_space<vmem>>, vector<1x8x8xf32>
    %83 = vector.shape_cast %82 : vector<1x8x8xf32> to vector<8x8xf32>
    %cst_49 = arith.constant dense<0.000000e+00> : vector<32x8xf32>
    %84 = tpu.matmul %8, %81, %cst_49 {dimension_numbers = #tpu.dot_dimension_numbers<[1], [0], [0], [1], [0, 0, 1, 1], [], []>} : vector<32x16xf32>, vector<16x8xf32>, vector<32x8xf32> -> vector<32x8xf32>
    %cst_50 = arith.constant dense<0.000000e+00> : vector<32x8xf32>
    %85 = tpu.matmul %13, %83, %cst_50 {dimension_numbers = #tpu.dot_dimension_numbers<[1], [0], [0], [1], [0, 0, 1, 1], [], []>} : vector<32x8xf32>, vector<8x8xf32>, vector<32x8xf32> -> vector<32x8xf32>
    %86 = vector.broadcast %23 : vector<1x8xf32> to vector<32x8xf32>
    %87 = arith.mulf %85, %86 : vector<32x8xf32>
    %cst_51 = arith.constant dense<0.000000e+00> : vector<32xf32>
    %88 = vector.multi_reduction <add>, %87, %cst_51 [1] : vector<32x8xf32> to vector<32xf32>
    %89 = vector.shape_cast %88 : vector<32xf32> to vector<32x1xf32>
    %90 = vector.broadcast %24 : vector<1x8xf32> to vector<32x8xf32>
    %91 = arith.mulf %84, %90 : vector<32x8xf32>
    %cst_52 = arith.constant dense<0.000000e+00> : vector<32xf32>
    %92 = vector.multi_reduction <add>, %91, %cst_52 [1] : vector<32x8xf32> to vector<32xf32>
    %93 = vector.shape_cast %92 : vector<32xf32> to vector<32x1xf32>
    %94 = arith.addf %89, %93 : vector<32x1xf32>
    %95 = arith.addf %94, %35 : vector<32x1xf32>
    %96 = arith.negf %95 : vector<32x1xf32>
    %97 = math.exp %96 : vector<32x1xf32>
    %cst_53 = arith.constant 1.000000e+00 : f32
    %98 = vector.broadcast %cst_53 : f32 to vector<32x1xf32>
    %99 = arith.addf %98, %97 : vector<32x1xf32>
    %100 = arith.divf %98, %99 : vector<32x1xf32>
    %101 = arith.mulf %39, %84 : vector<32x8xf32>
    %102 = vector.broadcast %100 : vector<32x1xf32> to vector<32x8xf32>
    %103 = arith.mulf %101, %102 : vector<32x8xf32>
    %cst_54 = arith.constant dense<0.000000e+00> : vector<8x8xf32>
    %104 = tpu.matmul %18, %103, %cst_54 {dimension_numbers = #tpu.dot_dimension_numbers<[1], [0], [0], [1], [0, 0, 1, 1], [], []>} : vector<8x32xf32>, vector<32x8xf32>, vector<8x8xf32> -> vector<8x8xf32>
    %105 = vector.broadcast %22 : vector<8x1xf32> to vector<8x8xf32>
    %106 = arith.divf %104, %105 : vector<8x8xf32>
    %cst_55 = arith.constant dense<0.000000e+00> : vector<8x16xf32>
    %107 = tpu.matmul %83, %27, %cst_55 {dimension_numbers = #tpu.dot_dimension_numbers<[1], [0], [0], [1], [0, 0, 1, 1], [], []>} : vector<8x8xf32>, vector<8x16xf32>, vector<8x16xf32> -> vector<8x16xf32>
    %cst_56 = arith.constant dense<0.000000e+00> : vector<8x16xf32>
    %108 = tpu.matmul %106, %28, %cst_56 {dimension_numbers = #tpu.dot_dimension_numbers<[1], [0], [0], [1], [0, 0, 1, 1], [], []>} : vector<8x8xf32>, vector<8x16xf32>, vector<8x16xf32> -> vector<8x16xf32>
    %109 = arith.addf %107, %108 : vector<8x16xf32>
    %110 = vector.broadcast %29 : vector<1x16xf32> to vector<8x16xf32>
    %111 = arith.addf %109, %110 : vector<8x16xf32>
    %cst_57 = arith.constant 0.000000e+00 : f32
    %112 = vector.broadcast %cst_57 : f32 to vector<8x16xf32>
    %113 = arith.cmpf oge, %111, %112 : vector<8x16xf32>
    %cst_58 = arith.constant 0.00999999977 : f32
    %114 = vector.broadcast %cst_58 : f32 to vector<8x16xf32>
    %115 = arith.mulf %114, %111 : vector<8x16xf32>
    %116 = arith.select %113, %111, %115 : vector<8x16xi1>, vector<8x16xf32>
    %c1_59 = arith.constant 1 : index
    %c0_60 = arith.constant 0 : index
    %c0_61 = arith.constant 0 : index
    %117 = vector.load %arg14[%c1_59, %c0_60, %c0_61] : memref<2x8x16xf32, #tpu.memory_space<vmem>>, vector<1x8x16xf32>
    %118 = vector.shape_cast %117 : vector<1x8x16xf32> to vector<8x16xf32>
    %119 = vector.shape_cast %116 : vector<8x16xf32> to vector<1x8x16xf32>
    tpu.vector_store %arg14[%c1_59, %c0_60, %c0_61], %119 {strides = array<i32>} : memref<2x8x16xf32, #tpu.memory_space<vmem>>, vector<1x8x16xf32>,
    return
  }
}

</mosaic_0001>

<llo_original>
// kernel: tpu_custom_call.1
$region0: #{tpu_custom_call.1}
  #allocation0 [shape = 'u32[]', space=smem, size = 0x4, offset = 0x4, fixed_abs, tag = 'smem constant byte address 0x4 - core index']
  #allocation1 [shape = 'u32[72,128]{1,0:T(1,128)}', space=vmem, size = 0x9000, scoped, tag = 'internal scratch']
  #allocation2 [shape = 'f32[1,1]{1,0:T(1,128)S(1)}', space=vmem, size = 0x200, scoped, tag = 'scoped memory for tpu_custom_call.1']
  #allocation3 [shape = 'f32[1,1]{1,0:T(1,128)S(6)}', space=smem, size = 0x200, scoped, tag = 'scoped memory for tpu_custom_call.1']
  %s0 = inlined_call_operand.vmem [shape: f32[2,16,8], index: 0, kind: input, shape index: {}]
  %s1 = inlined_call_operand.vmem [shape: f32[2,8,8], index: 1, kind: input, shape index: {}]
  %s2 = inlined_call_operand.vmem [shape: f32[32,1], index: 2, kind: input, shape index: {}]
  %s3 = inlined_call_operand.vmem [shape: s32[32,1], index: 3, kind: input, shape index: {}]
  %s4 = inlined_call_operand.vmem [shape: s32[32,1], index: 4, kind: input, shape index: {}]
  %s5 = inlined_call_operand.vmem [shape: s32[1,32], index: 5, kind: input, shape index: {}]
  %s6 = inlined_call_operand.vmem [shape: f32[1,8], index: 6, kind: input, shape index: {}]
  %s7 = inlined_call_operand.vmem [shape: f32[1,8], index: 7, kind: input, shape index: {}]
  %s8 = inlined_call_operand.<no memory space> [shape: f32[1,1], index: 8, kind: input, shape index: {}]
  %s9 = inlined_call_operand.vmem [shape: f32[1,8], index: 9, kind: input, shape index: {}]
  %s10 = inlined_call_operand.vmem [shape: f32[8,16], index: 10, kind: input, shape index: {}]
  %s11 = inlined_call_operand.vmem [shape: f32[8,16], index: 11, kind: input, shape index: {}]
  %s12 = inlined_call_operand.vmem [shape: f32[1,16], index: 12, kind: input, shape index: {}]
  %s13 = inlined_call_operand.<no memory space> [shape: f32[1,1], index: 13, kind: input, shape index: {}]
  %s14 = inlined_call_operand.hbm [shape: f32[2,8,16], index: 14, kind: output, shape index: {}]
  %s15 = sld [smem:[#allocation0]]
  $region66: #{tpu_custom_call.1} parent=0
    _
  %s17 = ssub.s32 1, %s15
  %s18 = scalar_select 0, %s17, %s15
  %v19 = vstv %s8
  %20 = vst [vmem:[#allocation2] sm:$0x1] %v19
  %21 = sst [smem:[#allocation3]] %s13
  $region1: #{tpu_custom_call.1} parent=0
    #allocation4 [shape = 'u8[8192]{0}', space=vmem, size = 0x2000, scoped, tag = 'output window, operand 0, single buffered']
    #allocation5 [shape = 's32[1]{0}', space=sflag, size = 0x4, scoped, tag = 'scoped memory for tpu_custom_call.1']
    %22 = vsyncpa [#allocation5], 0
    // Predicated region
    $region2: #{tpu_custom_call.1} parent=1 // pred_check
      _
    $region3: #{tpu_custom_call.1} parent=1 // pred_check_branch
      %24 = sbr.rel (0) target = $region5
    $region4: #{tpu_custom_call.1} parent=1 // pred_region
      _
    $region5: #{tpu_custom_call.1} parent=1 // pred_fallthru
      _
    // Predicated region
    $region6: #{tpu_custom_call.1} parent=1 // pred_check
      _
    $region7: #{tpu_custom_call.1} parent=1 // pred_check_branch
      %26 = sbr.rel (0) target = $region9
    $region8: #{tpu_custom_call.1} parent=1 // pred_region
      _
    $region9: #{tpu_custom_call.1} parent=1 // pred_fallthru
      _
    // Predicated region
    $region10: #{tpu_custom_call.1} parent=1 // pred_check
      _
    $region11: #{tpu_custom_call.1} parent=1 // pred_check_branch
      %28 = sbr.rel (0) target = $region13
    $region12: #{tpu_custom_call.1} parent=1 // pred_region
      _
    $region13: #{tpu_custom_call.1} parent=1 // pred_fallthru
      _
    // Predicated region
    $region14: #{tpu_custom_call.1} parent=1 // pred_check
      _
    $region15: #{tpu_custom_call.1} parent=1 // pred_check_branch
      %30 = sbr.rel (0) target = $region17
    $region16: #{tpu_custom_call.1} parent=1 // pred_region
      _
    $region17: #{tpu_custom_call.1} parent=1 // pred_fallthru
      _
    // Predicated region
    $region18: #{tpu_custom_call.1} parent=1 // pred_check
      _
    $region19: #{tpu_custom_call.1} parent=1 // pred_check_branch
      %32 = sbr.rel (0) target = $region21
    $region20: #{tpu_custom_call.1} parent=1 // pred_region
      _
    $region21: #{tpu_custom_call.1} parent=1 // pred_fallthru
      _
    // Predicated region
    $region22: #{tpu_custom_call.1} parent=1 // pred_check
      _
    $region23: #{tpu_custom_call.1} parent=1 // pred_check_branch
      %34 = sbr.rel (0) target = $region25
    $region24: #{tpu_custom_call.1} parent=1 // pred_region
      _
    $region25: #{tpu_custom_call.1} parent=1 // pred_fallthru
      _
    // Predicated region
    $region26: #{tpu_custom_call.1} parent=1 // pred_check
      _
    $region27: #{tpu_custom_call.1} parent=1 // pred_check_branch
      %36 = sbr.rel (0) target = $region29
    $region28: #{tpu_custom_call.1} parent=1 // pred_region
      _
    $region29: #{tpu_custom_call.1} parent=1 // pred_fallthru
      _
    // Predicated region
    $region30: #{tpu_custom_call.1} parent=1 // pred_check
      _
    $region31: #{tpu_custom_call.1} parent=1 // pred_check_branch
      %38 = sbr.rel (0) target = $region33
    $region32: #{tpu_custom_call.1} parent=1 // pred_region
      _
    $region33: #{tpu_custom_call.1} parent=1 // pred_fallthru
      _
    // Predicated region
    $region34: #{tpu_custom_call.1} parent=1 // pred_check
      _
    $region35: #{tpu_custom_call.1} parent=1 // pred_check_branch
      %40 = sbr.rel (0) target = $region37
    $region36: #{tpu_custom_call.1} parent=1 // pred_region
      _
    $region37: #{tpu_custom_call.1} parent=1 // pred_fallthru
      _
    // Predicated region
    $region38: #{tpu_custom_call.1} parent=1 // pred_check
      _
    $region39: #{tpu_custom_call.1} parent=1 // pred_check_branch
      %42 = sbr.rel (0) target = $region41
    $region40: #{tpu_custom_call.1} parent=1 // pred_region
      _
    $region41: #{tpu_custom_call.1} parent=1 // pred_fallthru
      _
    // Predicated region
    $region42: #{tpu_custom_call.1} parent=1 // pred_check
      _
    $region43: #{tpu_custom_call.1} parent=1 // pred_check_branch
      %44 = sbr.rel (0) target = $region45
    $region44: #{tpu_custom_call.1} parent=1 // pred_region
      _
    $region45: #{tpu_custom_call.1} parent=1 // pred_fallthru
      _
    // Predicated region
    $region46: #{tpu_custom_call.1} parent=1 // pred_check
      _
    $region47: #{tpu_custom_call.1} parent=1 // pred_check_branch
      %46 = sbr.rel (0) target = $region49
    $region48: #{tpu_custom_call.1} parent=1 // pred_region
      _
    $region49: #{tpu_custom_call.1} parent=1 // pred_fallthru
      _
    // Predicated region
    $region50: #{tpu_custom_call.1} parent=1 // pred_check
      _
    $region51: #{tpu_custom_call.1} parent=1 // pred_check_branch
      %48 = sbr.rel (0) target = $region53
    $region52: #{tpu_custom_call.1} parent=1 // pred_region
      _
    $region53: #{tpu_custom_call.1} parent=1 // pred_fallthru
      _
    // Predicated region
    $region54: #{tpu_custom_call.1} parent=1 // pred_check
      _
    $region55: #{tpu_custom_call.1} parent=1 // pred_check_branch
      %50 = sbr.rel (0) target = $region57
    $region56: #{tpu_custom_call.1} parent=1 // pred_region
      _
    $region57: #{tpu_custom_call.1} parent=1 // pred_fallthru
      _
    %v51 = vld [vmem:[%s2] sm:$0xff]
    %v52 = vld [vmem:[%s2 + $0x8] sm:$0xff]
    %v53 = vld [vmem:[%s2 + $0x10] sm:$0xff]
    %v54 = vld [vmem:[%s2 + $0x18] sm:$0xff]
    %v55 = vld [vmem:[%s3] sm:$0xff]
    %v56 = vld [vmem:[%s3 + $0x8] sm:$0xff]
    %v57 = vld [vmem:[%s3 + $0x10] sm:$0xff]
    %v58 = vld [vmem:[%s3 + $0x18] sm:$0xff]
    %v59 = vld [vmem:[%s4] sm:$0xff]
    %v60 = vld [vmem:[%s4 + $0x8] sm:$0xff]
    %v61 = vld [vmem:[%s4 + $0x10] sm:$0xff]
    %v62 = vld [vmem:[%s4 + $0x18] sm:$0xff]
    %v63 = vld [vmem:[%s5] sm:$0x1]
    %v64 = vlaneseq
    %v65 = vand.u32 %v64, 127
    %66 = vset.pattern.permute.xlu0 0
    %67 = vperm.xlu0 %66, %v55
    %v68 = vpop.permute.xlu0 %67
    %69 = vset.pattern.permute.xlu0 0
    %70 = vperm.xlu0 %69, %v56
    %v71 = vpop.permute.xlu0 %70
    %72 = vset.pattern.permute.xlu0 0
    %73 = vperm.xlu0 %72, %v57
    %v74 = vpop.permute.xlu0 %73
    %75 = vset.pattern.permute.xlu0 0
    %76 = vperm.xlu0 %75, %v58
    %v77 = vpop.permute.xlu0 %76
    %vm78 = vcmp.eq.s32.totalorder %v68, %v65
    %vm79 = vcmp.eq.s32.totalorder %v71, %v65
    %vm80 = vcmp.eq.s32.totalorder %v74, %v65
    %vm81 = vcmp.eq.s32.totalorder %v77, %v65
    %v82 = vsel %vm78, 1, 0
    %v83 = vsel %vm79, 1, 0
    %v84 = vsel %vm80, 1, 0
    %v85 = vsel %vm81, 1, 0
    %v86 = vcvt.s32.f32 %v82
    %v87 = vcvt.s32.f32 %v83
    %v88 = vcvt.s32.f32 %v84
    %v89 = vcvt.s32.f32 %v85
    %90 = vset.pattern.permute.xlu0 0
    %91 = vperm.xlu0 %90, %v59
    %v92 = vpop.permute.xlu0 %91
    %93 = vset.pattern.permute.xlu0 0
    %94 = vperm.xlu0 %93, %v60
    %v95 = vpop.permute.xlu0 %94
    %96 = vset.pattern.permute.xlu0 0
    %97 = vperm.xlu0 %96, %v61
    %v98 = vpop.permute.xlu0 %97
    %99 = vset.pattern.permute.xlu0 0
    %100 = vperm.xlu0 %99, %v62
    %v101 = vpop.permute.xlu0 %100
    %vm102 = vcmp.eq.s32.totalorder %v92, %v65
    %vm103 = vcmp.eq.s32.totalorder %v95, %v65
    %vm104 = vcmp.eq.s32.totalorder %v98, %v65
    %vm105 = vcmp.eq.s32.totalorder %v101, %v65
    %v106 = vsel %vm102, 1, 0
    %v107 = vsel %vm103, 1, 0
    %v108 = vsel %vm104, 1, 0
    %v109 = vsel %vm105, 1, 0
    %v110 = vcvt.s32.f32 %v106
    %v111 = vcvt.s32.f32 %v107
    %v112 = vcvt.s32.f32 %v108
    %v113 = vcvt.s32.f32 %v109
    %v114 = vlaneseq
    %v115 = vshrl.u32 %v114, 7
    %v116 = vperm.slane %v63, 0
    %vm117 = vcmp.eq.s32.totalorder %v116, %v115
    %v118 = vsel %vm117, 1, 0
    %v119 = vcvt.s32.f32 %v118
    %vm120 = vcmask 261120
    %v121 = vsel %vm120, %v119, 0.0
    %122 = vadd.xlane.f32.xlu0 %v121
    %v123 = vpop.xlane.xlu0 %122
    %v124 = vmax.f32 %v123, 1.0
    %v125 = vld [vmem:[%s6] sm:$0x1]
    %v126 = vld [vmem:[%s7] sm:$0x1]
    %v127 = vld [vmem:[#allocation2] sm:$0x1]
    %s128 = sld [smem:[#allocation3]]
    %v129 = vld [vmem:[%s10] sm:$0xff]
    %v130 = vld [vmem:[%s11] sm:$0xff]
    %v131 = vld [vmem:[%s12] sm:$0x1]
    %v133 = vperm.slane %v127, 0
    %v135 = vmul.f32 %v51, %v133
    %v136 = vmul.f32 %v52, %v133
    %v137 = vmul.f32 %v53, %v133
    %v138 = vmul.f32 %v54, %v133
    %v139 = vadd.f32 %v135, 0.0
    %v140 = vadd.f32 %v136, 0.0
    %v141 = vadd.f32 %v137, 0.0
    %v142 = vadd.f32 %v138, 0.0
    %v143 = vstv %s128
    %v144 = vadd.f32 %v139, %v143
    %v145 = vadd.f32 %v140, %v143
    %v146 = vadd.f32 %v141, %v143
    %v147 = vadd.f32 %v142, %v143
    %v148 = vld [vmem:[%s9] sm:$0x1]
    %150 = vset.pattern.permute.xlu0 0
    %151 = vperm.xlu0 %150, %v51
    %v152 = vpop.permute.xlu0 %151
    %155 = vset.pattern.permute.xlu0 0
    %156 = vperm.xlu0 %155, %v52
    %v157 = vpop.permute.xlu0 %156
    %160 = vset.pattern.permute.xlu0 0
    %161 = vperm.xlu0 %160, %v53
    %v162 = vpop.permute.xlu0 %161
    %165 = vset.pattern.permute.xlu0 0
    %166 = vperm.xlu0 %165, %v54
    %v167 = vpop.permute.xlu0 %166
    %v170 = vperm.slane %v148, 0
    %v172 = vmul.f32 %v152, %v170
    %v173 = vmul.f32 %v157, %v170
    %v174 = vmul.f32 %v162, %v170
    %v175 = vmul.f32 %v167, %v170
    %v176 = vld [vmem:[%s0] sm:$0xff]
    %v177 = vld [vmem:[%s0 + $0x8] sm:$0xff]
    %v178 = vld [vmem:[%s1] sm:$0xff]
    %vm179 = vcmask 130048
    %v181 = vsel %vm179, %v86, 0
    %v184 = vsel %vm179, %v87, 0
    %v187 = vsel %vm179, %v88, 0
    %v190 = vsel %vm179, %v89, 0
    %192 = vmatpush.msra.mxu0 0.0
    %193 = vmatpush.msra.mxu0 0.0
    %194 = vmatpush.msra.mxu0 0.0
    %195 = vmatpush.msra.mxu0 0.0
    %196 = vmatpush.msra.mxu0 0.0
    %197 = vmatpush.msra.mxu0 0.0
    %198 = vmatpush.msra.mxu0 0.0
    %199 = vmatpush.msra.mxu0 0.0
    %200 = vmatpush.msra.mxu0 0.0
    %201 = vmatpush.msra.mxu0 0.0
    %202 = vmatpush.msra.mxu0 0.0
    %203 = vmatpush.msra.mxu0 0.0
    %204 = vmatpush.msra.mxu0 0.0
    %205 = vmatpush.msra.mxu0 0.0
    %206 = vmatpush.msra.mxu0 %v177
    %207 = vmatpush.msra.mxu0 %v176
    %208 = vmatmul.f32.gmra.mxu0 %v181
    %v209 = vpop.f32.mrf.mxu0
    %v210 = vadd.f32 0.0, %v209
    %211 = vmatmul.f32.gmra.mxu0 %v184
    %v212 = vpop.f32.mrf.mxu0
    %v213 = vadd.f32 0.0, %v212
    %214 = vmatmul.f32.gmra.mxu0 %v187
    %v215 = vpop.f32.mrf.mxu0
    %v216 = vadd.f32 0.0, %v215
    %217 = vmatmul.f32.gmra.mxu0 %v190
    %v218 = vpop.f32.mrf.mxu0
    %v219 = vadd.f32 0.0, %v218
    %220 = vdwg.mxu0
    %vm221 = vcmask 64512
    %v223 = vsel %vm221, %v110, 0
    %v226 = vsel %vm221, %v111, 0
    %v229 = vsel %vm221, %v112, 0
    %v232 = vsel %vm221, %v113, 0
    %234 = vmatpush.msra.mxu0 0.0
    %235 = vmatpush.msra.mxu0 0.0
    %236 = vmatpush.msra.mxu0 0.0
    %237 = vmatpush.msra.mxu0 0.0
    %238 = vmatpush.msra.mxu0 0.0
    %239 = vmatpush.msra.mxu0 0.0
    %240 = vmatpush.msra.mxu0 0.0
    %241 = vmatpush.msra.mxu0 0.0
    %242 = vmatpush.msra.mxu0 0.0
    %243 = vmatpush.msra.mxu0 0.0
    %244 = vmatpush.msra.mxu0 0.0
    %245 = vmatpush.msra.mxu0 0.0
    %246 = vmatpush.msra.mxu0 0.0
    %247 = vmatpush.msra.mxu0 0.0
    %248 = vmatpush.msra.mxu0 0.0
    %249 = vmatpush.msra.mxu0 %v178
    %250 = vmatmul.f32.gmra.mxu0 %v223
    %v251 = vpop.f32.mrf.mxu0
    %v252 = vadd.f32 0.0, %v251
    %253 = vmatmul.f32.gmra.mxu0 %v226
    %v254 = vpop.f32.mrf.mxu0
    %v255 = vadd.f32 0.0, %v254
    %256 = vmatmul.f32.gmra.mxu0 %v229
    %v257 = vpop.f32.mrf.mxu0
    %v258 = vadd.f32 0.0, %v257
    %259 = vmatmul.f32.gmra.mxu0 %v232
    %v260 = vpop.f32.mrf.mxu0
    %v261 = vadd.f32 0.0, %v260
    %262 = vdwg.mxu0
    %v264 = vperm.slane %v125, 0
    %v266 = vmul.f32 %v252, %v264
    %v267 = vmul.f32 %v255, %v264
    %v268 = vmul.f32 %v258, %v264
    %v269 = vmul.f32 %v261, %v264
    %v270 = vsel %vm221, %v266, 0.0
    %271 = vadd.xlane.f32.xlu0 %v270
    %v272 = vpop.xlane.xlu0 %271
    %v273 = vsel %vm221, %v267, 0.0
    %274 = vadd.xlane.f32.xlu0 %v273
    %v275 = vpop.xlane.xlu0 %274
    %v276 = vsel %vm221, %v268, 0.0
    %277 = vadd.xlane.f32.xlu0 %v276
    %v278 = vpop.xlane.xlu0 %277
    %v279 = vsel %vm221, %v269, 0.0
    %280 = vadd.xlane.f32.xlu0 %v279
    %v281 = vpop.xlane.xlu0 %280
    %v283 = vperm.slane %v126, 0
    %v285 = vmul.f32 %v210, %v283
    %v286 = vmul.f32 %v213, %v283
    %v287 = vmul.f32 %v216, %v283
    %v288 = vmul.f32 %v219, %v283
    %v289 = vsel %vm221, %v285, 0.0
    %290 = vadd.xlane.f32.xlu0 %v289
    %v291 = vpop.xlane.xlu0 %290
    %v292 = vsel %vm221, %v286, 0.0
    %293 = vadd.xlane.f32.xlu0 %v292
    %v294 = vpop.xlane.xlu0 %293
    %v295 = vsel %vm221, %v287, 0.0
    %296 = vadd.xlane.f32.xlu0 %v295
    %v297 = vpop.xlane.xlu0 %296
    %v298 = vsel %vm221, %v288, 0.0
    %299 = vadd.xlane.f32.xlu0 %v298
    %v300 = vpop.xlane.xlu0 %299
    %v301 = vadd.f32 %v272, %v291
    %v302 = vadd.f32 %v275, %v294
    %v303 = vadd.f32 %v278, %v297
    %v304 = vadd.f32 %v281, %v300
    %v305 = vadd.f32 %v301, %v144
    %v306 = vadd.f32 %v302, %v145
    %v307 = vadd.f32 %v303, %v146
    %v308 = vadd.f32 %v304, %v147
    %v309 = vxor.u32 %v305, 2147483648
    %v310 = vxor.u32 %v306, 2147483648
    %v311 = vxor.u32 %v307, 2147483648
    %v312 = vxor.u32 %v308, 2147483648
    %v313 = vmul.f32 %v309, 1.442695
    %v314 = vpow.pop %v313
    %v315 = vmul.f32 %v310, 1.442695
    %v316 = vpow.pop %v315
    %v317 = vmul.f32 %v311, 1.442695
    %v318 = vpow.pop %v317
    %v319 = vmul.f32 %v312, 1.442695
    %v320 = vpow.pop %v319
    %v321 = vadd.f32 %v314, 1.0
    %v322 = vadd.f32 %v316, 1.0
    %v323 = vadd.f32 %v318, 1.0
    %v324 = vadd.f32 %v320, 1.0
    %v325 = vrcp.pop %v321
    %v326 = vmul.f32 %v321, %v325
    %v327 = vsub.f32 1.0, %v326
    %v328 = vmul.f32 %v325, %v327
    %v329 = vadd.f32 %v325, %v328
    %vm330 = vweird.f32 %v321
    %vm331 = vweird.f32 %v325
    %vm332 = vmor %vm330, %vm331
    %v333 = vsel %vm332, %v325, %v329
    %v334 = vand.u32 2147483647, %v321
    %vm335 = vcmp.eq.f32.partialorder %v334, 8.507059e+37
    %v336 = vand.u32 %v321, 2147483648
    %v337 = vor.u32 1.1754944e-38, %v336
    %v338 = vsel %vm335, %v337, %v333
    %v339 = vmul.f32 1.0, %v338
    %v340 = vrcp.pop %v322
    %v341 = vmul.f32 %v322, %v340
    %v342 = vsub.f32 1.0, %v341
    %v343 = vmul.f32 %v340, %v342
    %v344 = vadd.f32 %v340, %v343
    %vm345 = vweird.f32 %v322
    %vm346 = vweird.f32 %v340
    %vm347 = vmor %vm345, %vm346
    %v348 = vsel %vm347, %v340, %v344
    %v349 = vand.u32 2147483647, %v322
    %vm350 = vcmp.eq.f32.partialorder %v349, 8.507059e+37
    %v351 = vand.u32 %v322, 2147483648
    %v352 = vor.u32 1.1754944e-38, %v351
    %v353 = vsel %vm350, %v352, %v348
    %v354 = vmul.f32 1.0, %v353
    %v355 = vrcp.pop %v323
    %v356 = vmul.f32 %v323, %v355
    %v357 = vsub.f32 1.0, %v356
    %v358 = vmul.f32 %v355, %v357
    %v359 = vadd.f32 %v355, %v358
    %vm360 = vweird.f32 %v323
    %vm361 = vweird.f32 %v355
    %vm362 = vmor %vm360, %vm361
    %v363 = vsel %vm362, %v355, %v359
    %v364 = vand.u32 2147483647, %v323
    %vm365 = vcmp.eq.f32.partialorder %v364, 8.507059e+37
    %v366 = vand.u32 %v323, 2147483648
    %v367 = vor.u32 1.1754944e-38, %v366
    %v368 = vsel %vm365, %v367, %v363
    %v369 = vmul.f32 1.0, %v368
    %v370 = vrcp.pop %v324
    %v371 = vmul.f32 %v324, %v370
    %v372 = vsub.f32 1.0, %v371
    %v373 = vmul.f32 %v370, %v372
    %v374 = vadd.f32 %v370, %v373
    %vm375 = vweird.f32 %v324
    %vm376 = vweird.f32 %v370
    %vm377 = vmor %vm375, %vm376
    %v378 = vsel %vm377, %v370, %v374
    %v379 = vand.u32 2147483647, %v324
    %vm380 = vcmp.eq.f32.partialorder %v379, 8.507059e+37
    %v381 = vand.u32 %v324, 2147483648
    %v382 = vor.u32 1.1754944e-38, %v381
    %v383 = vsel %vm380, %v382, %v378
    %v384 = vmul.f32 1.0, %v383
    %v385 = vmul.f32 %v172, %v210
    %v386 = vmul.f32 %v173, %v213
    %v387 = vmul.f32 %v174, %v216
    %v388 = vmul.f32 %v175, %v219
    %390 = vset.pattern.permute.xlu0 0
    %391 = vperm.xlu0 %390, %v339
    %v392 = vpop.permute.xlu0 %391
    %395 = vset.pattern.permute.xlu0 0
    %396 = vperm.xlu0 %395, %v354
    %v397 = vpop.permute.xlu0 %396
    %400 = vset.pattern.permute.xlu0 0
    %401 = vperm.xlu0 %400, %v369
    %v402 = vpop.permute.xlu0 %401
    %405 = vset.pattern.permute.xlu0 0
    %406 = vperm.xlu0 %405, %v384
    %v407 = vpop.permute.xlu0 %406
    %v409 = vmul.f32 %v385, %v392
    %v410 = vmul.f32 %v386, %v397
    %v411 = vmul.f32 %v387, %v402
    %v412 = vmul.f32 %v388, %v407
    %v414 = vsel %vm120, %v119, 0
    %416 = vmatpush.msra.mxu0 0.0
    %417 = vmatpush.msra.mxu0 0.0
    %418 = vmatpush.msra.mxu0 0.0
    %419 = vmatpush.msra.mxu0 0.0
    %420 = vmatpush.msra.mxu0 0.0
    %421 = vmatpush.msra.mxu0 0.0
    %422 = vmatpush.msra.mxu0 0.0
    %423 = vmatpush.msra.mxu0 0.0
    %424 = vmatpush.msra.mxu0 0.0
    %425 = vmatpush.msra.mxu0 0.0
    %426 = vmatpush.msra.mxu0 0.0
    %427 = vmatpush.msra.mxu0 0.0
    %428 = vmatpush.msra.mxu0 %v412
    %429 = vmatpush.msra.mxu0 %v411
    %430 = vmatpush.msra.mxu0 %v410
    %431 = vmatpush.msra.mxu0 %v409
    %432 = vmatmul.f32.gmra.mxu0 %v414
    %v433 = vpop.f32.mrf.mxu0
    %v434 = vadd.f32 0.0, %v433
    %435 = vdwg.mxu0
    %v436 = vrcp.pop %v124
    %v437 = vmul.f32 %v124, %v436
    %v438 = vsub.f32 1.0, %v437
    %v439 = vmul.f32 %v436, %v438
    %v440 = vadd.f32 %v436, %v439
    %vm441 = vweird.f32 %v124
    %vm442 = vweird.f32 %v436
    %vm443 = vmor %vm441, %vm442
    %v444 = vsel %vm443, %v436, %v440
    %v445 = vand.u32 2147483647, %v124
    %vm446 = vcmp.eq.f32.partialorder %v445, 8.507059e+37
    %v447 = vand.u32 %v124, 2147483648
    %v448 = vor.u32 1.1754944e-38, %v447
    %v449 = vsel %vm446, %v448, %v444
    %v450 = vmul.f32 %v434, %v449
    %v452 = vsel %vm221, %v450, 0
    %454 = vmatpush.msra.mxu0 0.0
    %455 = vmatpush.msra.mxu0 0.0
    %456 = vmatpush.msra.mxu0 0.0
    %457 = vmatpush.msra.mxu0 0.0
    %458 = vmatpush.msra.mxu0 0.0
    %459 = vmatpush.msra.mxu0 0.0
    %460 = vmatpush.msra.mxu0 0.0
    %461 = vmatpush.msra.mxu0 0.0
    %462 = vmatpush.msra.mxu0 0.0
    %463 = vmatpush.msra.mxu0 0.0
    %464 = vmatpush.msra.mxu0 0.0
    %465 = vmatpush.msra.mxu0 0.0
    %466 = vmatpush.msra.mxu0 0.0
    %467 = vmatpush.msra.mxu0 0.0
    %468 = vmatpush.msra.mxu0 0.0
    %469 = vmatpush.msra.mxu0 %v130
    %470 = vmatmul.f32.gmra.mxu0 %v452
    %v471 = vpop.f32.mrf.mxu0
    %v472 = vadd.f32 0.0, %v471
    %473 = vdwg.mxu0
    %v475 = vsel %vm221, %v178, 0
    %477 = vmatpush.msra.mxu0 0.0
    %478 = vmatpush.msra.mxu0 0.0
    %479 = vmatpush.msra.mxu0 0.0
    %480 = vmatpush.msra.mxu0 0.0
    %481 = vmatpush.msra.mxu0 0.0
    %482 = vmatpush.msra.mxu0 0.0
    %483 = vmatpush.msra.mxu0 0.0
    %484 = vmatpush.msra.mxu0 0.0
    %485 = vmatpush.msra.mxu0 0.0
    %486 = vmatpush.msra.mxu0 0.0
    %487 = vmatpush.msra.mxu0 0.0
    %488 = vmatpush.msra.mxu0 0.0
    %489 = vmatpush.msra.mxu0 0.0
    %490 = vmatpush.msra.mxu0 0.0
    %491 = vmatpush.msra.mxu0 0.0
    %492 = vmatpush.msra.mxu0 %v129
    %493 = vmatmul.f32.gmra.mxu0 %v475
    %v494 = vpop.f32.mrf.mxu0
    %v495 = vadd.f32 %v472, %v494
    %496 = vdwg.mxu0
    %v498 = vperm.slane %v131, 0
    %v500 = vadd.f32 %v495, %v498
    %vm501 = vcmp.ge.f32.partialorder %v500, 0.0
    %v502 = vmul.f32 %v500, 0.01
    %v503 = vsel %vm501, %v500, %v502
    %504 = vst.msk [vmem:[#allocation4] sm:$0xff] %vm179, %v503
    %s505 = scalar_lea.vmem %s0, 16
    %v506 = vld [vmem:[%s505] sm:$0xff]
    %v507 = vld [vmem:[%s505 + $0x8] sm:$0xff]
    %s508 = scalar_lea.vmem %s1, 8
    %v509 = vld [vmem:[%s508] sm:$0xff]
    %510 = vmatpush.msra.mxu0 0.0
    %511 = vmatpush.msra.mxu0 0.0
    %512 = vmatpush.msra.mxu0 0.0
    %513 = vmatpush.msra.mxu0 0.0
    %514 = vmatpush.msra.mxu0 0.0
    %515 = vmatpush.msra.mxu0 0.0
    %516 = vmatpush.msra.mxu0 0.0
    %517 = vmatpush.msra.mxu0 0.0
    %518 = vmatpush.msra.mxu0 0.0
    %519 = vmatpush.msra.mxu0 0.0
    %520 = vmatpush.msra.mxu0 0.0
    %521 = vmatpush.msra.mxu0 0.0
    %522 = vmatpush.msra.mxu0 0.0
    %523 = vmatpush.msra.mxu0 0.0
    %524 = vmatpush.msra.mxu0 %v507
    %525 = vmatpush.msra.mxu0 %v506
    %526 = vmatmul.f32.gmra.mxu0 %v181
    %v527 = vpop.f32.mrf.mxu0
    %v528 = vadd.f32 0.0, %v527
    %529 = vmatmul.f32.gmra.mxu0 %v184
    %v530 = vpop.f32.mrf.mxu0
    %v531 = vadd.f32 0.0, %v530
    %532 = vmatmul.f32.gmra.mxu0 %v187
    %v533 = vpop.f32.mrf.mxu0
    %v534 = vadd.f32 0.0, %v533
    %535 = vmatmul.f32.gmra.mxu0 %v190
    %v536 = vpop.f32.mrf.mxu0
    %v537 = vadd.f32 0.0, %v536
    %538 = vdwg.mxu0
    %539 = vmatpush.msra.mxu0 0.0
    %540 = vmatpush.msra.mxu0 0.0
    %541 = vmatpush.msra.mxu0 0.0
    %542 = vmatpush.msra.mxu0 0.0
    %543 = vmatpush.msra.mxu0 0.0
    %544 = vmatpush.msra.mxu0 0.0
    %545 = vmatpush.msra.mxu0 0.0
    %546 = vmatpush.msra.mxu0 0.0
    %547 = vmatpush.msra.mxu0 0.0
    %548 = vmatpush.msra.mxu0 0.0
    %549 = vmatpush.msra.mxu0 0.0
    %550 = vmatpush.msra.mxu0 0.0
    %551 = vmatpush.msra.mxu0 0.0
    %552 = vmatpush.msra.mxu0 0.0
    %553 = vmatpush.msra.mxu0 0.0
    %554 = vmatpush.msra.mxu0 %v509
    %555 = vmatmul.f32.gmra.mxu0 %v223
    %v556 = vpop.f32.mrf.mxu0
    %v557 = vadd.f32 0.0, %v556
    %558 = vmatmul.f32.gmra.mxu0 %v226
    %v559 = vpop.f32.mrf.mxu0
    %v560 = vadd.f32 0.0, %v559
    %561 = vmatmul.f32.gmra.mxu0 %v229
    %v562 = vpop.f32.mrf.mxu0
    %v563 = vadd.f32 0.0, %v562
    %564 = vmatmul.f32.gmra.mxu0 %v232
    %v565 = vpop.f32.mrf.mxu0
    %v566 = vadd.f32 0.0, %v565
    %567 = vdwg.mxu0
    %v568 = vmul.f32 %v557, %v264
    %v569 = vmul.f32 %v560, %v264
    %v570 = vmul.f32 %v563, %v264
    %v571 = vmul.f32 %v566, %v264
    %v572 = vsel %vm221, %v568, 0.0
    %573 = vadd.xlane.f32.xlu0 %v572
    %v574 = vpop.xlane.xlu0 %573
    %v575 = vsel %vm221, %v569, 0.0
    %576 = vadd.xlane.f32.xlu0 %v575
    %v577 = vpop.xlane.xlu0 %576
    %v578 = vsel %vm221, %v570, 0.0
    %579 = vadd.xlane.f32.xlu0 %v578
    %v580 = vpop.xlane.xlu0 %579
    %v581 = vsel %vm221, %v571, 0.0
    %582 = vadd.xlane.f32.xlu0 %v581
    %v583 = vpop.xlane.xlu0 %582
    %v584 = vmul.f32 %v528, %v283
    %v585 = vmul.f32 %v531, %v283
    %v586 = vmul.f32 %v534, %v283
    %v587 = vmul.f32 %v537, %v283
    %v588 = vsel %vm221, %v584, 0.0
    %589 = vadd.xlane.f32.xlu0 %v588
    %v590 = vpop.xlane.xlu0 %589
    %v591 = vsel %vm221, %v585, 0.0
    %592 = vadd.xlane.f32.xlu0 %v591
    %v593 = vpop.xlane.xlu0 %592
    %v594 = vsel %vm221, %v586, 0.0
    %595 = vadd.xlane.f32.xlu0 %v594
    %v596 = vpop.xlane.xlu0 %595
    %v597 = vsel %vm221, %v587, 0.0
    %598 = vadd.xlane.f32.xlu0 %v597
    %v599 = vpop.xlane.xlu0 %598
    %v600 = vadd.f32 %v574, %v590
    %v601 = vadd.f32 %v577, %v593
    %v602 = vadd.f32 %v580, %v596
    %v603 = vadd.f32 %v583, %v599
    %v604 = vadd.f32 %v600, %v144
    %v605 = vadd.f32 %v601, %v145
    %v606 = vadd.f32 %v602, %v146
    %v607 = vadd.f32 %v603, %v147
    %v608 = vxor.u32 %v604, 2147483648
    %v609 = vxor.u32 %v605, 2147483648
    %v610 = vxor.u32 %v606, 2147483648
    %v611 = vxor.u32 %v607, 2147483648
    %v612 = vmul.f32 %v608, 1.442695
    %v613 = vpow.pop %v612
    %v614 = vmul.f32 %v609, 1.442695
    %v615 = vpow.pop %v614
    %v616 = vmul.f32 %v610, 1.442695
    %v617 = vpow.pop %v616
    %v618 = vmul.f32 %v611, 1.442695
    %v619 = vpow.pop %v618
    %v620 = vadd.f32 %v613, 1.0
    %v621 = vadd.f32 %v615, 1.0
    %v622 = vadd.f32 %v617, 1.0
    %v623 = vadd.f32 %v619, 1.0
    %v624 = vrcp.pop %v620
    %v625 = vmul.f32 %v620, %v624
    %v626 = vsub.f32 1.0, %v625
    %v627 = vmul.f32 %v624, %v626
    %v628 = vadd.f32 %v624, %v627
    %vm629 = vweird.f32 %v620
    %vm630 = vweird.f32 %v624
    %vm631 = vmor %vm629, %vm630
    %v632 = vsel %vm631, %v624, %v628
    %v633 = vand.u32 2147483647, %v620
    %vm634 = vcmp.eq.f32.partialorder %v633, 8.507059e+37
    %v635 = vand.u32 %v620, 2147483648
    %v636 = vor.u32 1.1754944e-38, %v635
    %v637 = vsel %vm634, %v636, %v632
    %v638 = vmul.f32 1.0, %v637
    %v639 = vrcp.pop %v621
    %v640 = vmul.f32 %v621, %v639
    %v641 = vsub.f32 1.0, %v640
    %v642 = vmul.f32 %v639, %v641
    %v643 = vadd.f32 %v639, %v642
    %vm644 = vweird.f32 %v621
    %vm645 = vweird.f32 %v639
    %vm646 = vmor %vm644, %vm645
    %v647 = vsel %vm646, %v639, %v643
    %v648 = vand.u32 2147483647, %v621
    %vm649 = vcmp.eq.f32.partialorder %v648, 8.507059e+37
    %v650 = vand.u32 %v621, 2147483648
    %v651 = vor.u32 1.1754944e-38, %v650
    %v652 = vsel %vm649, %v651, %v647
    %v653 = vmul.f32 1.0, %v652
    %v654 = vrcp.pop %v622
    %v655 = vmul.f32 %v622, %v654
    %v656 = vsub.f32 1.0, %v655
    %v657 = vmul.f32 %v654, %v656
    %v658 = vadd.f32 %v654, %v657
    %vm659 = vweird.f32 %v622
    %vm660 = vweird.f32 %v654
    %vm661 = vmor %vm659, %vm660
    %v662 = vsel %vm661, %v654, %v658
    %v663 = vand.u32 2147483647, %v622
    %vm664 = vcmp.eq.f32.partialorder %v663, 8.507059e+37
    %v665 = vand.u32 %v622, 2147483648
    %v666 = vor.u32 1.1754944e-38, %v665
    %v667 = vsel %vm664, %v666, %v662
    %v668 = vmul.f32 1.0, %v667
    %v669 = vrcp.pop %v623
    %v670 = vmul.f32 %v623, %v669
    %v671 = vsub.f32 1.0, %v670
    %v672 = vmul.f32 %v669, %v671
    %v673 = vadd.f32 %v669, %v672
    %vm674 = vweird.f32 %v623
    %vm675 = vweird.f32 %v669
    %vm676 = vmor %vm674, %vm675
    %v677 = vsel %vm676, %v669, %v673
    %v678 = vand.u32 2147483647, %v623
    %vm679 = vcmp.eq.f32.partialorder %v678, 8.507059e+37
    %v680 = vand.u32 %v623, 2147483648
    %v681 = vor.u32 1.1754944e-38, %v680
    %v682 = vsel %vm679, %v681, %v677
    %v683 = vmul.f32 1.0, %v682
    %v684 = vmul.f32 %v172, %v528
    %v685 = vmul.f32 %v173, %v531
    %v686 = vmul.f32 %v174, %v534
    %v687 = vmul.f32 %v175, %v537
    %689 = vset.pattern.permute.xlu0 0
    %690 = vperm.xlu0 %689, %v638
    %v691 = vpop.permute.xlu0 %690
    %694 = vset.pattern.permute.xlu0 0
    %695 = vperm.xlu0 %694, %v653
    %v696 = vpop.permute.xlu0 %695
    %699 = vset.pattern.permute.xlu0 0
    %700 = vperm.xlu0 %699, %v668
    %v701 = vpop.permute.xlu0 %700
    %704 = vset.pattern.permute.xlu0 0
    %705 = vperm.xlu0 %704, %v683
    %v706 = vpop.permute.xlu0 %705
    %v708 = vmul.f32 %v684, %v691
    %v709 = vmul.f32 %v685, %v696
    %v710 = vmul.f32 %v686, %v701
    %v711 = vmul.f32 %v687, %v706
    %712 = vmatpush.msra.mxu0 0.0
    %713 = vmatpush.msra.mxu0 0.0
    %714 = vmatpush.msra.mxu0 0.0
    %715 = vmatpush.msra.mxu0 0.0
    %716 = vmatpush.msra.mxu0 0.0
    %717 = vmatpush.msra.mxu0 0.0
    %718 = vmatpush.msra.mxu0 0.0
    %719 = vmatpush.msra.mxu0 0.0
    %720 = vmatpush.msra.mxu0 0.0
    %721 = vmatpush.msra.mxu0 0.0
    %722 = vmatpush.msra.mxu0 0.0
    %723 = vmatpush.msra.mxu0 0.0
    %724 = vmatpush.msra.mxu0 %v711
    %725 = vmatpush.msra.mxu0 %v710
    %726 = vmatpush.msra.mxu0 %v709
    %727 = vmatpush.msra.mxu0 %v708
    %728 = vmatmul.f32.gmra.mxu0 %v414
    %v729 = vpop.f32.mrf.mxu0
    %v730 = vadd.f32 0.0, %v729
    %731 = vdwg.mxu0
    %v732 = vmul.f32 %v730, %v449
    %v734 = vsel %vm221, %v732, 0
    %736 = vmatpush.msra.mxu0 0.0
    %737 = vmatpush.msra.mxu0 0.0
    %738 = vmatpush.msra.mxu0 0.0
    %739 = vmatpush.msra.mxu0 0.0
    %740 = vmatpush.msra.mxu0 0.0
    %741 = vmatpush.msra.mxu0 0.0
    %742 = vmatpush.msra.mxu0 0.0
    %743 = vmatpush.msra.mxu0 0.0
    %744 = vmatpush.msra.mxu0 0.0
    %745 = vmatpush.msra.mxu0 0.0
    %746 = vmatpush.msra.mxu0 0.0
    %747 = vmatpush.msra.mxu0 0.0
    %748 = vmatpush.msra.mxu0 0.0
    %749 = vmatpush.msra.mxu0 0.0
    %750 = vmatpush.msra.mxu0 0.0
    %751 = vmatpush.msra.mxu0 %v130
    %752 = vmatmul.f32.gmra.mxu0 %v734
    %v753 = vpop.f32.mrf.mxu0
    %v754 = vadd.f32 0.0, %v753
    %755 = vdwg.mxu0
    %v757 = vsel %vm221, %v509, 0
    %759 = vmatpush.msra.mxu0 0.0
    %760 = vmatpush.msra.mxu0 0.0
    %761 = vmatpush.msra.mxu0 0.0
    %762 = vmatpush.msra.mxu0 0.0
    %763 = vmatpush.msra.mxu0 0.0
    %764 = vmatpush.msra.mxu0 0.0
    %765 = vmatpush.msra.mxu0 0.0
    %766 = vmatpush.msra.mxu0 0.0
    %767 = vmatpush.msra.mxu0 0.0
    %768 = vmatpush.msra.mxu0 0.0
    %769 = vmatpush.msra.mxu0 0.0
    %770 = vmatpush.msra.mxu0 0.0
    %771 = vmatpush.msra.mxu0 0.0
    %772 = vmatpush.msra.mxu0 0.0
    %773 = vmatpush.msra.mxu0 0.0
    %774 = vmatpush.msra.mxu0 %v129
    %775 = vmatmul.f32.gmra.mxu0 %v757
    %v776 = vpop.f32.mrf.mxu0
    %v777 = vadd.f32 %v754, %v776
    %778 = vdwg.mxu0
    %v779 = vadd.f32 %v777, %v498
    %vm780 = vcmp.ge.f32.partialorder %v779, 0.0
    %v781 = vmul.f32 %v779, 0.01
    %v782 = vsel %vm780, %v779, %v781
    %s783 = scalar_lea.vmem [#allocation4], 8
    %784 = vst.msk [vmem:[%s783] sm:$0xff] %vm179, %v782
    // Predicated region
    $region58: #{tpu_custom_call.1} parent=1 // pred_check
      _
    $region59: #{tpu_custom_call.1} parent=1 // pred_check_branch
      %786 = sbr.rel (0) target = $region61
    $region60: #{tpu_custom_call.1} parent=1 // pred_region
      %788 = vsyncadd [#allocation5], 0
      %s789 = sshll.u32 [#allocation4], 4
      %s790 = int_to_ptr.vmem [resolvable:$true] %s789
      %s791 = sshll.u32 %s14, 4
      %s792 = int_to_ptr.hbm [resolvable:$true] %s791
      %797 = dma.vmem_to_hbm [thread:$0]  %s790, 256, %s792, [#allocation5], 128, 128, 8
    $region61: #{tpu_custom_call.1} parent=1 // pred_fallthru
      _
    // Predicated region
    $region62: #{tpu_custom_call.1} parent=1 // pred_check
      _
    $region63: #{tpu_custom_call.1} parent=1 // pred_check_branch
      %799 = sbr.rel (0) target = $region65
    $region64: #{tpu_custom_call.1} parent=1 // pred_region
      %801 = dma.done [#allocation5], 256
    $region65: #{tpu_custom_call.1} parent=1 // pred_fallthru
      _
    %802 = vsyncpa [#allocation5], 1

</llo_original>
